<compile_context>
chip_gen: v6e
topology: v6e:2x2x1
jax: 0.10.0
libtpu: 0.0.40
codegen_flags: <defaults>
</compile_context>

<pallas_src>
import functools

import numpy as np
import jax
import jax.numpy as jnp
from jax import lax
from jax.experimental import pallas as pl
from jax.experimental.pallas import tpu as pltpu

DROP_P = 0.3
KEEP_P = 1.0 - DROP_P
# Exact uint32 threshold: P(bits < threshold) == 0.7 (plain numpy literal).
KEEP_THRESHOLD = np.uint32((7 * (2 ** 32)) // 10)

LANE = 128
SUBLANE_BF16 = 16          # bf16 packs 2 rows/sublane -> native (16, 128) tile


def _round_up(n, m):
    return ((n + m - 1) // m) * m


def _cdiv(a, b):
    return (a + b - 1) // b


def _hash_u32(x):
    """splitmix32-style finalizer; uint32 arithmetic wraps mod 2**32."""
    x = (x ^ (x >> 16)) * jnp.uint32(0x7FEB352D)
    x = (x ^ (x >> 15)) * jnp.uint32(0x846CA68B)
    x = x ^ (x >> 16)
    return x


def mlp_kernel(seed_ref, x_ref, w1_ref, b1_ref, w2_ref, b2_ref, o_ref):
    i = pl.program_id(0)

    # ---- hidden = relu(x @ W1 + b1): bf16 MXU operands, f32 accumulation ----
    x = x_ref[...].astype(jnp.bfloat16)
    h = jnp.dot(x, w1_ref[...], preferred_element_type=jnp.float32)
    h = jnp.maximum(h + b1_ref[...], 0.0)
    hb = h.astype(jnp.bfloat16)       # select on bf16: half the vreg work

    # ---- Dropout(p=0.3): portable counter-based hash PRNG -------------------
    # The 1/keep_p inverted-dropout scale is pre-folded into W2 (prepare_params),
    # so this is a pure mask select.
    tile_b, h_pad = hb.shape
    row = lax.broadcasted_iota(jnp.int32, hb.shape, 0).astype(jnp.uint32)
    col = lax.broadcasted_iota(jnp.int32, hb.shape, 1).astype(jnp.uint32)
    gid = (jnp.uint32(i * tile_b) + row) * jnp.uint32(h_pad) + col
    s = jnp.uint32(seed_ref[0]) * jnp.uint32(0x9E3779B9) + jnp.uint32(1)
    bits = _hash_u32(gid ^ s)
    keep = bits < KEEP_THRESHOLD
    hb = jnp.where(keep, hb, jnp.zeros_like(hb))

    # ---- out = dropout(h) @ (W2 / keep_p) + b2 -------------------------------
    out = jnp.dot(hb, w2_ref[...], preferred_element_type=jnp.float32)
    o_ref[...] = (out + b2_ref[...]).astype(o_ref.dtype)


def _resident_spec(shape):
    """Constant-index (grid-resident) block; single-buffered when supported,
    since its contents never change across the grid (saves VMEM, key on
    v7x's 64 MiB physical VMEM)."""
    idx = lambda i, seed: (0, 0)
    if hasattr(pl, "Buffered"):
        try:
            return pl.BlockSpec(shape, idx, pipeline_mode=pl.Buffered(1))
        except (TypeError, ValueError):
            pass
    return pl.BlockSpec(shape, idx)


def prepare_params(w1, b1, w2, b2):
    """One-time weight prep: lane padding, bf16 cast, dropout scale fold.

    Call once and reuse across forward calls; per-call work then only touches x.
    """
    n_feature, n_hidden = w1.shape
    n_output = w2.shape[1]
    f_pad = _round_up(n_feature, LANE)
    h_pad = _round_up(n_hidden, LANE)
    o_pad = _round_up(n_output, LANE)

    w1_p = jnp.zeros((f_pad, h_pad), jnp.bfloat16).at[:n_feature, :n_hidden].set(
        w1.astype(jnp.bfloat16))
    b1_p = jnp.zeros((1, h_pad), jnp.float32).at[:, :n_hidden].set(
        b1.reshape(1, -1).astype(jnp.float32))
    # Fold the 1/keep_p inverted-dropout scale into W2 once.
    w2_scaled = (w2.astype(jnp.float32) * np.float32(1.0 / KEEP_P)).astype(jnp.bfloat16)
    w2_p = jnp.zeros((h_pad, o_pad), jnp.bfloat16).at[:n_hidden, :n_output].set(w2_scaled)
    b2_p = jnp.zeros((1, o_pad), jnp.float32).at[:, :n_output].set(
        b2.reshape(1, -1).astype(jnp.float32))

    dims = (n_feature, n_hidden, n_output)
    return (w1_p, b1_p, w2_p, b2_p), dims


@functools.partial(jax.jit, static_argnames=("dims", "target_tile_b"))
def net_forward(seed, x, w1_p, b1_p, w2_p, b2_p, dims, target_tile_b=1024):
    n_feature, n_hidden, n_output = dims
    batch = x.shape[0]
    f_pad, h_pad = w1_p.shape
    o_pad = w2_p.shape[1]

    # ---- batch tile policy: >=2 tiles when possible, multiple of 16, minimal
    # batch padding (avoid a mostly-wasted tail tile) --------------------------
    n_tiles_wanted = max(2, _cdiv(batch, target_tile_b))
    tile_b = max(SUBLANE_BF16,
                 _round_up(_cdiv(batch, n_tiles_wanted), SUBLANE_BF16))
    b_pad = _round_up(batch, tile_b)
    n_tiles = b_pad // tile_b

    # ---- x: pad only if genuinely needed; bf16 cast happens in-kernel --------
    if batch == b_pad and n_feature == f_pad:
        x_in = x
    else:
        x_in = jnp.zeros((b_pad, f_pad), jnp.bfloat16).at[:batch, :n_feature].set(
            x.astype(jnp.bfloat16))
    x_bytes = x_in.dtype.itemsize

    # ---- VMEM budget: single-buffered weights, double-buffered x/out tiles,
    # live intermediates (h f32 + h bf16 + mask bits) ---------------------------
    vmem_est = (w1_p.size * 2 + w2_p.size * 2 + b1_p.size * 4 + b2_p.size * 4
                + 2 * tile_b * f_pad * x_bytes
                + 2 * tile_b * o_pad * 2
                + tile_b * h_pad * (4 + 2 + 4))
    vmem_limit = int(min(max(int(1.5 * vmem_est), 16 * 2 ** 20), 96 * 2 ** 20))
    # TODO(synk): if resident weights exceed ~32 MiB (v7x has only 64 MiB
    # physical VMEM), add a hidden-dim grid axis with an f32 accumulator and
    # pl.when finalize instead of keeping both weight matrices resident.

    flops = 2 * b_pad * (f_pad * h_pad + h_pad * o_pad)
    bytes_accessed = (b_pad * f_pad * x_bytes + b_pad * o_pad * 2
                      + w1_p.size * 2 + w2_p.size * 2
                      + b1_p.size * 4 + b2_p.size * 4)
    cost = pl.CostEstimate(flops=flops, transcendentals=0,
                           bytes_accessed=bytes_accessed)

    grid_spec = pltpu.PrefetchScalarGridSpec(
        num_scalar_prefetch=1,                           # dropout seed -> SMEM
        grid=(n_tiles,),
        in_specs=[
            pl.BlockSpec((tile_b, f_pad), lambda i, seed: (i, 0)),   # x tile
            _resident_spec((f_pad, h_pad)),                          # W1
            _resident_spec((1, h_pad)),                              # b1
            _resident_spec((h_pad, o_pad)),                          # W2 (pre-scaled)
            _resident_spec((1, o_pad)),                              # b2
        ],
        out_specs=pl.BlockSpec((tile_b, o_pad), lambda i, seed: (i, 0)),
    )

    out_p = pl.pallas_call(
        mlp_kernel,
        out_shape=jax.ShapeDtypeStruct((b_pad, o_pad), jnp.bfloat16),
        grid_spec=grid_spec,
        compiler_params=pltpu.CompilerParams(
            dimension_semantics=("parallel",),           # batch tiles independent
            vmem_limit_bytes=vmem_limit),
        cost_estimate=cost,
    )(seed, x_in, w1_p, b1_p, w2_p, b2_p)

    return out_p[:batch, :n_output].astype(x.dtype)


def init_params(key, n_feature, n_hidden, n_output):
    """Deterministic init mirroring torch.nn.Linear's U(-1/sqrt(fan_in), ...)."""
    k1, k2, k3, k4 = jax.random.split(key, 4)
    bound1 = 1.0 / np.sqrt(n_feature)
    bound2 = 1.0 / np.sqrt(n_hidden)
    # Stored already-transposed: (in, out), so the kernel does x @ W.
    w1 = jax.random.uniform(k1, (n_feature, n_hidden), jnp.float32, -bound1, bound1)
    b1 = jax.random.uniform(k2, (n_hidden,), jnp.float32, -bound1, bound1)
    w2 = jax.random.uniform(k3, (n_hidden, n_output), jnp.float32, -bound2, bound2)
    b2 = jax.random.uniform(k4, (n_output,), jnp.float32, -bound2, bound2)
    return w1, b1, w2, b2


if __name__ == "__main__":
    # Small shapes consistent with Net(n_feature, n_hidden, n_output)
    batch, n_feature, n_hidden, n_output = 8, 16, 32, 4

    key = jax.random.PRNGKey(0)
    kx, kp = jax.random.split(key)
    x = jax.random.normal(kx, (batch, n_feature), jnp.float32)
    w1, b1, w2, b2 = init_params(kp, n_feature, n_hidden, n_output)

    # One-time weight prep (padding, bf16 cast, dropout scale folded into W2).
    (w1_p, b1_p, w2_p, b2_p), dims = prepare_params(w1, b1, w2, b2)

    seed = jnp.array([1234], dtype=jnp.int32)   # deterministic dropout seed

    out = net_forward(seed, x, w1_p, b1_p, w2_p, b2_p, dims=dims)
    jax.block_until_ready(out)

    assert out.shape == (batch, n_output)
    assert out.dtype == jnp.float32
    assert bool(jnp.all(jnp.isfinite(out)))
    print("KERNEL_OK")
</pallas_src>

<mosaic_0001>
module attributes {stable_mosaic.version = 11 : i64} {
  func.func @mlp_kernel(%arg0: i32, %arg1: memref<1xi32, #tpu.memory_space<smem>>, %arg2: memref<16x128xbf16, #tpu.memory_space<vmem>>, %arg3: memref<128x128xbf16, #tpu.memory_space<vmem>>, %arg4: memref<1x128xf32, #tpu.memory_space<vmem>>, %arg5: memref<128x128xbf16, #tpu.memory_space<vmem>>, %arg6: memref<1x128xf32, #tpu.memory_space<vmem>>, %arg7: memref<16x128xbf16, #tpu.memory_space<vmem>>) attributes {dimension_semantics = [#tpu.dimension_semantics<parallel>], iteration_bounds = array<i64: 1>, scalar_prefetch = 1 : i64, scratch_operands = 0 : i64, tpu.core_type = #tpu.core_type<tc>, window_params = [{transform_indices = @transform_0, window_bounds = array<i64: 16, 128>}, {pipeline_mode = #tpu.pipeline_mode<synchronous>, transform_indices = @transform_1, window_bounds = array<i64: 128, 128>}, {pipeline_mode = #tpu.pipeline_mode<synchronous>, transform_indices = @transform_2, window_bounds = array<i64: 1, 128>}, {pipeline_mode = #tpu.pipeline_mode<synchronous>, transform_indices = @transform_3, window_bounds = array<i64: 128, 128>}, {pipeline_mode = #tpu.pipeline_mode<synchronous>, transform_indices = @transform_4, window_bounds = array<i64: 1, 128>}, {transform_indices = @transform_5, window_bounds = array<i64: 16, 128>}]} {
    %c0 = arith.constant 0 : index
    %c0_0 = arith.constant 0 : index
    %0 = vector.load %arg2[%c0, %c0_0] : memref<16x128xbf16, #tpu.memory_space<vmem>>, vector<16x128xbf16>
    %c0_1 = arith.constant 0 : index
    %c0_2 = arith.constant 0 : index
    %1 = vector.load %arg3[%c0_1, %c0_2] : memref<128x128xbf16, #tpu.memory_space<vmem>>, vector<128x128xbf16>
    %cst = arith.constant dense<0.000000e+00> : vector<16x128xf32>
    %2 = tpu.matmul %0, %1, %cst {dimension_numbers = #tpu.dot_dimension_numbers<[1], [0], [0], [1], [0, 0, 1, 1], [], []>} : vector<16x128xbf16>, vector<128x128xbf16>, vector<16x128xf32> -> vector<16x128xf32>
    %c0_3 = arith.constant 0 : index
    %c0_4 = arith.constant 0 : index
    %3 = vector.load %arg4[%c0_3, %c0_4] : memref<1x128xf32, #tpu.memory_space<vmem>>, vector<1x128xf32>
    %4 = vector.broadcast %3 : vector<1x128xf32> to vector<16x128xf32>
    %5 = arith.addf %2, %4 : vector<16x128xf32>
    %cst_5 = arith.constant 0.000000e+00 : f32
    %6 = vector.broadcast %cst_5 : f32 to vector<16x128xf32>
    %7 = arith.maximumf %5, %6 : vector<16x128xf32>
    %8 = arith.truncf %7 : vector<16x128xf32> to vector<16x128xbf16>
    %9 = tpu.iota {dimensions = array<i32: 0>} : vector<16x128xi32>
    %10 = tpu.iota {dimensions = array<i32: 1>} : vector<16x128xi32>
    %c16_i32 = arith.constant 16 : i32
    %11 = arith.muli %arg0, %c16_i32 : i32
    %12 = vector.broadcast %11 : i32 to vector<16x128xi32>
    %13 = arith.addi %12, %9 : vector<16x128xi32>
    %c128_i32 = arith.constant 128 : i32
    %14 = vector.broadcast %c128_i32 : i32 to vector<16x128xi32>
    %15 = arith.muli %13, %14 : vector<16x128xi32>
    %16 = arith.addi %15, %10 : vector<16x128xi32>
    %c0_6 = arith.constant 0 : index
    %17 = memref.load %arg1[%c0_6] : memref<1xi32, #tpu.memory_space<smem>>
    %c-1640531527_i32 = arith.constant -1640531527 : i32
    %18 = arith.muli %17, %c-1640531527_i32 : i32
    %c1_i32 = arith.constant 1 : i32
    %19 = arith.addi %18, %c1_i32 : i32
    %20 = vector.broadcast %19 : i32 to vector<16x128xi32>
    %21 = arith.xori %16, %20 : vector<16x128xi32>
    %c16_i32_7 = arith.constant 16 : i32
    %22 = vector.broadcast %c16_i32_7 : i32 to vector<16x128xi32>
    %23 = arith.shrui %21, %22 : vector<16x128xi32>
    %24 = arith.xori %21, %23 : vector<16x128xi32>
    %c2146121005_i32 = arith.constant 2146121005 : i32
    %25 = vector.broadcast %c2146121005_i32 : i32 to vector<16x128xi32>
    %26 = arith.muli %24, %25 : vector<16x128xi32>
    %c15_i32 = arith.constant 15 : i32
    %27 = vector.broadcast %c15_i32 : i32 to vector<16x128xi32>
    %28 = arith.shrui %26, %27 : vector<16x128xi32>
    %29 = arith.xori %26, %28 : vector<16x128xi32>
    %c-2073254261_i32 = arith.constant -2073254261 : i32
    %30 = vector.broadcast %c-2073254261_i32 : i32 to vector<16x128xi32>
    %31 = arith.muli %29, %30 : vector<16x128xi32>
    %c16_i32_8 = arith.constant 16 : i32
    %32 = vector.broadcast %c16_i32_8 : i32 to vector<16x128xi32>
    %33 = arith.shrui %31, %32 : vector<16x128xi32>
    %34 = arith.xori %31, %33 : vector<16x128xi32>
    %c-1288490189_i32 = arith.constant -1288490189 : i32
    %35 = vector.broadcast %c-1288490189_i32 : i32 to vector<16x128xi32>
    %36 = arith.cmpi ult, %34, %35 : vector<16x128xi32>
    %cst_9 = arith.constant 0.000000e+00 : bf16
    %37 = vector.broadcast %cst_9 : bf16 to vector<16x128xbf16>
    %38 = arith.select %36, %8, %37 : vector<16x128xi1>, vector<16x128xbf16>
    %c0_10 = arith.constant 0 : index
    %c0_11 = arith.constant 0 : index
    %39 = vector.load %arg5[%c0_10, %c0_11] : memref<128x128xbf16, #tpu.memory_space<vmem>>, vector<128x128xbf16>
    %cst_12 = arith.constant dense<0.000000e+00> : vector<16x128xf32>
    %40 = tpu.matmul %38, %39, %cst_12 {dimension_numbers = #tpu.dot_dimension_numbers<[1], [0], [0], [1], [0, 0, 1, 1], [], []>} : vector<16x128xbf16>, vector<128x128xbf16>, vector<16x128xf32> -> vector<16x128xf32>
    %c0_13 = arith.constant 0 : index
    %c0_14 = arith.constant 0 : index
    %41 = vector.load %arg6[%c0_13, %c0_14] : memref<1x128xf32, #tpu.memory_space<vmem>>, vector<1x128xf32>
    %42 = vector.broadcast %41 : vector<1x128xf32> to vector<16x128xf32>
    %43 = arith.addf %40, %42 : vector<16x128xf32>
    %44 = arith.truncf %43 : vector<16x128xf32> to vector<16x128xbf16>
    %c0_15 = arith.constant 0 : index
    %c0_16 = arith.constant 0 : index
    %45 = vector.load %arg7[%c0_15, %c0_16] : memref<16x128xbf16, #tpu.memory_space<vmem>>, vector<16x128xbf16>
    tpu.vector_store %arg7[%c0_15, %c0_16], %44 {strides = array<i32>} : memref<16x128xbf16, #tpu.memory_space<vmem>>, vector<16x128xbf16>,
    return
  }
  func.func @transform_0(%arg0: i32, %arg1: memref<1xi32, #tpu.memory_space<smem>>) -> (i32, i32) {
    %c0_i32 = arith.constant 0 : i32
    %c0_i32_0 = arith.constant 0 : i32
    return %arg0, %c0_i32 : i32, i32
  }
  func.func @transform_1(%arg0: i32, %arg1: memref<1xi32, #tpu.memory_space<smem>>) -> (i32, i32) {
    %c0_i32 = arith.constant 0 : i32
    %c0_i32_0 = arith.constant 0 : i32
    %c0_i32_1 = arith.constant 0 : i32
    return %c0_i32, %c0_i32_0 : i32, i32
  }
  func.func @transform_2(%arg0: i32, %arg1: memref<1xi32, #tpu.memory_space<smem>>) -> (i32, i32) {
    %c0_i32 = arith.constant 0 : i32
    %c0_i32_0 = arith.constant 0 : i32
    %c0_i32_1 = arith.constant 0 : i32
    return %c0_i32, %c0_i32_0 : i32, i32
  }
  func.func @transform_3(%arg0: i32, %arg1: memref<1xi32, #tpu.memory_space<smem>>) -> (i32, i32) {
    %c0_i32 = arith.constant 0 : i32
    %c0_i32_0 = arith.constant 0 : i32
    %c0_i32_1 = arith.constant 0 : i32
    return %c0_i32, %c0_i32_0 : i32, i32
  }
  func.func @transform_4(%arg0: i32, %arg1: memref<1xi32, #tpu.memory_space<smem>>) -> (i32, i32) {
    %c0_i32 = arith.constant 0 : i32
    %c0_i32_0 = arith.constant 0 : i32
    %c0_i32_1 = arith.constant 0 : i32
    return %c0_i32, %c0_i32_0 : i32, i32
  }
  func.func @transform_5(%arg0: i32, %arg1: memref<1xi32, #tpu.memory_space<smem>>) -> (i32, i32) {
    %c0_i32 = arith.constant 0 : i32
    %c0_i32_0 = arith.constant 0 : i32
    return %arg0, %c0_i32 : i32, i32
  }
}

</mosaic_0001>

<llo_original>
// kernel: net_forward.1
$region0: #{net_forward.1}
  #allocation0 [shape = 'u32[]', space=smem, size = 0x4, offset = 0x4, fixed_abs, tag = 'smem constant byte address 0x4 - core index']
  #allocation1 [shape = 'u32[144,128]{1,0:T(1,128)}', space=vmem, size = 0x12000, scoped, tag = 'internal scratch']
  #allocation2 [shape = 's32[1]{0}', space=sflag, size = 0x4, scoped, tag = 'scoped memory for net_forward.1']
  #allocation3 [shape = 's32[1]{0:T(128)S(6)}', space=smem, size = 0x200, scoped, tag = 'prefetched SMEM operand 0']
  %s0 = inlined_call_operand.<no memory space> [shape: s32[1], index: 0, kind: input, shape index: {}]
  %s1 = inlined_call_operand.vmem [shape: bf16[16,128], index: 1, kind: input, shape index: {}]
  %s2 = inlined_call_operand.hbm [shape: bf16[128,128], index: 2, kind: input, shape index: {}]
  %s3 = inlined_call_operand.vmem [shape: f32[1,128], index: 3, kind: input, shape index: {}]
  %s4 = inlined_call_operand.hbm [shape: bf16[128,128], index: 4, kind: input, shape index: {}]
  %s5 = inlined_call_operand.vmem [shape: f32[1,128], index: 5, kind: input, shape index: {}]
  %s6 = inlined_call_operand.vmem [shape: bf16[16,128], index: 6, kind: output, shape index: {}]
  %s7 = sld [smem:[#allocation0]]
  $region38: #{net_forward.1} parent=0
    _
  %s9 = ssub.s32 1, %s7
  %s10 = scalar_select 0, %s9, %s7
  %11 = sst [smem:[#allocation3]] %s0
  $region1: #{net_forward.1} parent=0
    #allocation4 [shape = 'u8[32768]{0}', space=vmem, size = 0x8000, scoped, tag = 'input window, operand 2, single buffered']
    #allocation5 [shape = 's32[1]{0}', space=sflag, size = 0x4, scoped, tag = 'scoped memory for net_forward.1']
    #allocation6 [shape = 'u8[32768]{0}', space=vmem, size = 0x8000, scoped, tag = 'input window, operand 4, single buffered']
    #allocation7 [shape = 's32[1]{0}', space=sflag, size = 0x4, scoped, tag = 'scoped memory for net_forward.1']
    %12 = vsyncpa [#allocation5], 0
    %13 = vsyncpa [#allocation7], 0
    // Predicated region
    $region2: #{net_forward.1} parent=1 // pred_check
      _
    $region3: #{net_forward.1} parent=1 // pred_check_branch
      %15 = sbr.rel (0) target = $region5
    $region4: #{net_forward.1} parent=1 // pred_region
      _
    $region5: #{net_forward.1} parent=1 // pred_fallthru
      _
    // Predicated region
    $region6: #{net_forward.1} parent=1 // pred_check
      _
    $region7: #{net_forward.1} parent=1 // pred_check_branch
      %17 = sbr.rel (0) target = $region9
    $region8: #{net_forward.1} parent=1 // pred_region
      %s19 = ssub.s32 1024, 1024
      %20 = vsyncadd [#allocation5], %s19
      %s21 = sshll.u32 [#allocation4], 4
      %s22 = int_to_ptr.vmem [resolvable:$true] %s21
      %27 = dma.hbm_to_vmem [thread:$0]  %s2, 1024, %s22, [#allocation5], 64, 64, 4
    $region9: #{net_forward.1} parent=1 // pred_fallthru
      _
    // Predicated region
    $region10: #{net_forward.1} parent=1 // pred_check
      _
    $region11: #{net_forward.1} parent=1 // pred_check_branch
      %29 = sbr.rel (0) target = $region13
    $region12: #{net_forward.1} parent=1 // pred_region
      _
    $region13: #{net_forward.1} parent=1 // pred_fallthru
      _
    // Predicated region
    $region14: #{net_forward.1} parent=1 // pred_check
      _
    $region15: #{net_forward.1} parent=1 // pred_check_branch
      %31 = sbr.rel (0) target = $region17
    $region16: #{net_forward.1} parent=1 // pred_region
      %s33 = ssub.s32 1024, 1024
      %34 = vsyncadd [#allocation7], %s33
      %s35 = sshll.u32 [#allocation6], 4
      %s36 = int_to_ptr.vmem [resolvable:$true] %s35
      %41 = dma.hbm_to_vmem [thread:$0]  %s4, 1024, %s36, [#allocation7], 64, 64, 4
    $region17: #{net_forward.1} parent=1 // pred_fallthru
      _
    // Predicated region
    $region18: #{net_forward.1} parent=1 // pred_check
      _
    $region19: #{net_forward.1} parent=1 // pred_check_branch
      %43 = sbr.rel (0) target = $region21
    $region20: #{net_forward.1} parent=1 // pred_region
      _
    $region21: #{net_forward.1} parent=1 // pred_fallthru
      _
    // Predicated region
    $region22: #{net_forward.1} parent=1 // pred_check
      _
    $region23: #{net_forward.1} parent=1 // pred_check_branch
      %45 = sbr.rel (0) target = $region25
    $region24: #{net_forward.1} parent=1 // pred_region
      %46 = dma.done [#allocation5], 1024
    $region25: #{net_forward.1} parent=1 // pred_fallthru
      _
    // Predicated region
    $region26: #{net_forward.1} parent=1 // pred_check
      _
    $region27: #{net_forward.1} parent=1 // pred_check_branch
      %48 = sbr.rel (0) target = $region29
    $region28: #{net_forward.1} parent=1 // pred_region
      %49 = dma.done [#allocation7], 1024
    $region29: #{net_forward.1} parent=1 // pred_fallthru
      _
    %v51 = vld [vmem:[%s1] sm:$0xf]
    %v52 = vld [vmem:[%s1 + $0x4] sm:$0xf]
    %v53 = vld [vmem:[#allocation4] sm:$0xf]
    %v54 = vld [vmem:[#allocation4 + $0x4] sm:$0xf]
    %v55 = vld [vmem:[#allocation4 + $0x8] sm:$0xf]
    %v56 = vld [vmem:[#allocation4 + $0xc] sm:$0xf]
    %v57 = vld [vmem:[#allocation4 + $0x10] sm:$0xf]
    %v58 = vld [vmem:[#allocation4 + $0x14] sm:$0xf]
    %v59 = vld [vmem:[#allocation4 + $0x18] sm:$0xf]
    %v60 = vld [vmem:[#allocation4 + $0x1c] sm:$0xf]
    %v61 = vld [vmem:[#allocation4 + $0x20] sm:$0xf]
    %v62 = vld [vmem:[#allocation4 + $0x24] sm:$0xf]
    %v63 = vld [vmem:[#allocation4 + $0x28] sm:$0xf]
    %v64 = vld [vmem:[#allocation4 + $0x2c] sm:$0xf]
    %v65 = vld [vmem:[#allocation4 + $0x30] sm:$0xf]
    %v66 = vld [vmem:[#allocation4 + $0x34] sm:$0xf]
    %v67 = vld [vmem:[#allocation4 + $0x38] sm:$0xf]
    %v68 = vld [vmem:[#allocation4 + $0x3c] sm:$0xf]
    %v69 = vld [vmem:[%s3] sm:$0x1]
    %v71 = vlaneseq
    %v72 = vshrl.u32 %v71, 7
    %v73 = vsub.s32 0, %v72
    %v74 = vrot.slane %v69, %v73
    %v78 = vunpack.c.l.b16 %v51
    %v79 = vunpack.c.l.b16 %v52
    %v80 = vpack.c.b16 %v79, %v78
    %v98 = vunpack.c.l.b16 %v53
    %v99 = vunpack.c.l.b16 %v54
    %v100 = vunpack.c.l.b16 %v55
    %v101 = vunpack.c.l.b16 %v56
    %v102 = vunpack.c.l.b16 %v57
    %v103 = vunpack.c.l.b16 %v58
    %v104 = vunpack.c.l.b16 %v59
    %v105 = vunpack.c.l.b16 %v60
    %v106 = vunpack.c.l.b16 %v61
    %v107 = vunpack.c.l.b16 %v62
    %v108 = vunpack.c.l.b16 %v63
    %v109 = vunpack.c.l.b16 %v64
    %v110 = vunpack.c.l.b16 %v65
    %v111 = vunpack.c.l.b16 %v66
    %v112 = vunpack.c.l.b16 %v67
    %v113 = vunpack.c.l.b16 %v68
    %v114 = vpack.c.b16 %v99, %v98
    %v115 = vpack.c.b16 %v101, %v100
    %v116 = vpack.c.b16 %v103, %v102
    %v117 = vpack.c.b16 %v105, %v104
    %v118 = vpack.c.b16 %v107, %v106
    %v119 = vpack.c.b16 %v109, %v108
    %v120 = vpack.c.b16 %v111, %v110
    %v121 = vpack.c.b16 %v113, %v112
    %130 = vmatprep.subr.bf16.mxu0 0
    %131 = vmatpush1.bf16.msra.mxu0 %v121
    %132 = vmatprep.subr.bf16.mxu0 0
    %133 = vmatpush1.bf16.msra.mxu0 %v120
    %134 = vmatprep.subr.bf16.mxu0 0
    %135 = vmatpush1.bf16.msra.mxu0 %v119
    %136 = vmatprep.subr.bf16.mxu0 0
    %137 = vmatpush1.bf16.msra.mxu0 %v118
    %138 = vmatprep.subr.bf16.mxu0 0
    %139 = vmatpush1.bf16.msra.mxu0 %v117
    %140 = vmatprep.subr.bf16.mxu0 0
    %141 = vmatpush1.bf16.msra.mxu0 %v116
    %142 = vmatprep.subr.bf16.mxu0 0
    %143 = vmatpush1.bf16.msra.mxu0 %v115
    %144 = vmatprep.subr.bf16.mxu0 0
    %145 = vmatpush1.bf16.msra.mxu0 %v114
    %146 = vmatprep.subr.bf16.mxu0 0
    %147 = vmatpush2.bf16.msra.mxu0 0
    %148 = vmatprep.subr.bf16.mxu0 0
    %149 = vmatpush2.bf16.msra.mxu0 0
    %150 = vmatprep.subr.bf16.mxu0 0
    %151 = vmatpush2.bf16.msra.mxu0 0
    %152 = vmatprep.subr.bf16.mxu0 0
    %153 = vmatpush2.bf16.msra.mxu0 0
    %154 = vmatprep.subr.bf16.mxu0 0
    %155 = vmatpush2.bf16.msra.mxu0 0
    %156 = vmatprep.subr.bf16.mxu0 0
    %157 = vmatpush2.bf16.msra.mxu0 0
    %158 = vmatprep.subr.bf16.mxu0 0
    %159 = vmatpush2.bf16.msra.mxu0 0
    %160 = vmatprep.subr.bf16.mxu0 0
    %161 = vmatpush2.bf16.msra.mxu0 0
    %162 = vmatprep.mubr.bf16.mxu0 0
    %163 = vmatmul.mubr.bf16.gmra.mxu0 %v80
    %v164 = vpop.f32.mrf.mxu0
    %v165 = vadd.f32 %v74, %v164
    %v166 = vpop.f32.mrf.mxu0
    %v167 = vpop.f32.mrf.mxu0
    %v168 = vadd.f32 %v74, %v167
    %v169 = vpop.f32.mrf.mxu0
    %170 = vdwg.mxu0
    %v171 = vmax.f32 %v165, 0.0
    %v172 = vmax.f32 %v168, 0.0
    %v173 = vpack.c.bf16 %v172, %v171
    %v174 = vlaneseq
    %v175 = vshrl.u32 %v174, 7
    %v176 = vadd.s32 %v175, 8
    %v177 = vlaneseq
    %v178 = vand.u32 %v177, 127
    %s179 = smul.u32 0, 16
    %v180 = vstv %s179
    %v181 = vadd.s32 %v180, %v175
    %v182 = vadd.s32 %v180, %v176
    %v183 = vmul.u32 %v181, 128
    %v184 = vmul.u32 %v182, 128
    %v185 = vadd.s32 %v183, %v178
    %v186 = vadd.s32 %v184, %v178
    %s187 = sld [smem:[#allocation3]]
    %s188 = smul.u32 %s187, 2654435769
    %s189 = sadd.s32 %s188, 1
    %v190 = vstv %s189
    %v191 = vxor.u32 %v185, %v190
    %v192 = vxor.u32 %v186, %v190
    %v193 = vshrl.u32 %v191, 16
    %v194 = vshrl.u32 %v192, 16
    %v195 = vxor.u32 %v191, %v193
    %v196 = vxor.u32 %v192, %v194
    %v197 = vmul.u32 %v195, 2146121005
    %v198 = vmul.u32 %v196, 2146121005
    %v199 = vshrl.u32 %v197, 15
    %v200 = vshrl.u32 %v198, 15
    %v201 = vxor.u32 %v197, %v199
    %v202 = vxor.u32 %v198, %v200
    %v203 = vmul.u32 %v201, 2221713035
    %v204 = vmul.u32 %v202, 2221713035
    %v205 = vshrl.u32 %v203, 16
    %v206 = vshrl.u32 %v204, 16
    %v207 = vxor.u32 %v203, %v205
    %v208 = vxor.u32 %v204, %v206
    %vm209 = vcmp.lt.u32.totalorder %v207, 3006477107
    %vm210 = vcmp.lt.u32.totalorder %v208, 3006477107
    %vm211 = vmpackc.low %vm210, %vm209
    %v212 = vsel %vm211, %v173, 0
    %v213 = vld [vmem:[#allocation6] sm:$0xf]
    %v214 = vld [vmem:[#allocation6 + $0x4] sm:$0xf]
    %v215 = vld [vmem:[#allocation6 + $0x8] sm:$0xf]
    %v216 = vld [vmem:[#allocation6 + $0xc] sm:$0xf]
    %v217 = vld [vmem:[#allocation6 + $0x10] sm:$0xf]
    %v218 = vld [vmem:[#allocation6 + $0x14] sm:$0xf]
    %v219 = vld [vmem:[#allocation6 + $0x18] sm:$0xf]
    %v220 = vld [vmem:[#allocation6 + $0x1c] sm:$0xf]
    %v221 = vld [vmem:[#allocation6 + $0x20] sm:$0xf]
    %v222 = vld [vmem:[#allocation6 + $0x24] sm:$0xf]
    %v223 = vld [vmem:[#allocation6 + $0x28] sm:$0xf]
    %v224 = vld [vmem:[#allocation6 + $0x2c] sm:$0xf]
    %v225 = vld [vmem:[#allocation6 + $0x30] sm:$0xf]
    %v226 = vld [vmem:[#allocation6 + $0x34] sm:$0xf]
    %v227 = vld [vmem:[#allocation6 + $0x38] sm:$0xf]
    %v228 = vld [vmem:[#allocation6 + $0x3c] sm:$0xf]
    %v229 = vld [vmem:[%s5] sm:$0x1]
    %v231 = vlaneseq
    %v232 = vshrl.u32 %v231, 7
    %v233 = vsub.s32 0, %v232
    %v234 = vrot.slane %v229, %v233
    %v252 = vunpack.c.l.b16 %v213
    %v253 = vunpack.c.l.b16 %v214
    %v254 = vunpack.c.l.b16 %v215
    %v255 = vunpack.c.l.b16 %v216
    %v256 = vunpack.c.l.b16 %v217
    %v257 = vunpack.c.l.b16 %v218
    %v258 = vunpack.c.l.b16 %v219
    %v259 = vunpack.c.l.b16 %v220
    %v260 = vunpack.c.l.b16 %v221
    %v261 = vunpack.c.l.b16 %v222
    %v262 = vunpack.c.l.b16 %v223
    %v263 = vunpack.c.l.b16 %v224
    %v264 = vunpack.c.l.b16 %v225
    %v265 = vunpack.c.l.b16 %v226
    %v266 = vunpack.c.l.b16 %v227
    %v267 = vunpack.c.l.b16 %v228
    %v268 = vpack.c.b16 %v253, %v252
    %v269 = vpack.c.b16 %v255, %v254
    %v270 = vpack.c.b16 %v257, %v256
    %v271 = vpack.c.b16 %v259, %v258
    %v272 = vpack.c.b16 %v261, %v260
    %v273 = vpack.c.b16 %v263, %v262
    %v274 = vpack.c.b16 %v265, %v264
    %v275 = vpack.c.b16 %v267, %v266
    %284 = vmatprep.subr.bf16.mxu0 0
    %285 = vmatpush1.bf16.msra.mxu0 %v275
    %286 = vmatprep.subr.bf16.mxu0 0
    %287 = vmatpush1.bf16.msra.mxu0 %v274
    %288 = vmatprep.subr.bf16.mxu0 0
    %289 = vmatpush1.bf16.msra.mxu0 %v273
    %290 = vmatprep.subr.bf16.mxu0 0
    %291 = vmatpush1.bf16.msra.mxu0 %v272
    %292 = vmatprep.subr.bf16.mxu0 0
    %293 = vmatpush1.bf16.msra.mxu0 %v271
    %294 = vmatprep.subr.bf16.mxu0 0
    %295 = vmatpush1.bf16.msra.mxu0 %v270
    %296 = vmatprep.subr.bf16.mxu0 0
    %297 = vmatpush1.bf16.msra.mxu0 %v269
    %298 = vmatprep.subr.bf16.mxu0 0
    %299 = vmatpush1.bf16.msra.mxu0 %v268
    %300 = vmatprep.subr.bf16.mxu0 0
    %301 = vmatpush2.bf16.msra.mxu0 0
    %302 = vmatprep.subr.bf16.mxu0 0
    %303 = vmatpush2.bf16.msra.mxu0 0
    %304 = vmatprep.subr.bf16.mxu0 0
    %305 = vmatpush2.bf16.msra.mxu0 0
    %306 = vmatprep.subr.bf16.mxu0 0
    %307 = vmatpush2.bf16.msra.mxu0 0
    %308 = vmatprep.subr.bf16.mxu0 0
    %309 = vmatpush2.bf16.msra.mxu0 0
    %310 = vmatprep.subr.bf16.mxu0 0
    %311 = vmatpush2.bf16.msra.mxu0 0
    %312 = vmatprep.subr.bf16.mxu0 0
    %313 = vmatpush2.bf16.msra.mxu0 0
    %314 = vmatprep.subr.bf16.mxu0 0
    %315 = vmatpush2.bf16.msra.mxu0 0
    %316 = vmatprep.mubr.bf16.mxu0 0
    %317 = vmatmul.mubr.bf16.gmra.mxu0 %v212
    %v318 = vpop.f32.mrf.mxu0
    %v319 = vadd.f32 %v234, %v318
    %v320 = vpop.f32.mrf.mxu0
    %v321 = vpop.f32.mrf.mxu0
    %v322 = vadd.f32 %v234, %v321
    %v323 = vpop.f32.mrf.mxu0
    %324 = vdwg.mxu0
    %v325 = vpack.c.bf16 %v322, %v319
    %v327 = vunpack.c.l.b16 %v325
    %v328 = vunpack.c.h.b16 %v325
    %v329 = vpack.c.b16 %v327, %v327
    %v330 = vpack.c.b16 %v328, %v328
    %333 = vst [vmem:[%s6] sm:$0xf] %v329
    %334 = vst [vmem:[%s6 + $0x4] sm:$0xf] %v330
    // Predicated region
    $region30: #{net_forward.1} parent=1 // pred_check
      _
    $region31: #{net_forward.1} parent=1 // pred_check_branch
      %336 = sbr.rel (0) target = $region33
    $region32: #{net_forward.1} parent=1 // pred_region
      _
    $region33: #{net_forward.1} parent=1 // pred_fallthru
      _
    // Predicated region
    $region34: #{net_forward.1} parent=1 // pred_check
      _
    $region35: #{net_forward.1} parent=1 // pred_check_branch
      %338 = sbr.rel (0) target = $region37
    $region36: #{net_forward.1} parent=1 // pred_region
      _
    $region37: #{net_forward.1} parent=1 // pred_fallthru
      _
    %339 = vsyncpa [#allocation5], 1
    %340 = vsyncpa [#allocation7], 1

</llo_original>
